<compile_context>
chip_gen: v7x
topology: tpu7x:2x2x1
jax: 0.10.0
libtpu: 0.0.40
codegen_flags: <defaults>
</compile_context>

<pallas_src>
import functools

import jax
import jax.numpy as jnp
from jax.experimental import pallas as pl
from jax.experimental.pallas import tpu as pltpu


def _round_up(x, m):
    return (x + m - 1) // m * m


def temporal_conv_kernel(x_ref, w_ref, b_ref, o_ref, *,
                         Cin, Cout, Cout_pad, T_out, align, win_rows,
                         offsets, approx_recip):
    """One lane tile of the fused 3-conv temporal gated block.

    x_ref: (R_pad, tm)               time-major rows, B*N columns on lanes
    w_ref: (n_off, 3*Cout_pad, W)    zero-padded weight variant per sublane offset
    b_ref: (3*Cout_pad, 1)           f32 biases (conv1 | conv2 | conv3)
    o_ref: (T_out, Cout, tm)
    """
    tm = o_ref.shape[-1]
    # Hoist the bias broadcast out of the unrolled time loop (JAX does not CSE
    # broadcast_in_dim inside loops).
    bias = jnp.broadcast_to(b_ref[...], (3 * Cout_pad, tm))
    for t in range(T_out):                        # static unroll; T_out is small
        row = t * Cin
        start = (row // align) * align            # sublane-aligned window start
        v = offsets.index(row - start)            # which zero-padded weight variant
        win = x_ref[start:start + win_rows, :]    # aligned (W, tm) slice, no realign
        # One MXU matmul produces P | PP | PPP for this output time step.
        s = jnp.dot(w_ref[v], win, preferred_element_type=jnp.float32) + bias
        p = s[:Cout_pad]
        pp = s[Cout_pad:2 * Cout_pad]
        ppp = s[2 * Cout_pad:]
        if approx_recip:
            # exp and the reciprocal both ride the EUP slot; VALU keeps mul/add.
            sig = pl.reciprocal(1.0 + jnp.exp(-pp), approx=True)
        else:
            sig = jax.nn.sigmoid(pp)
        h = jnp.maximum(p * sig + ppp, 0.0)       # f32 epilogue on all gens
        o_ref[t, :, :] = h[:Cout].astype(o_ref.dtype)


def _vmem_budget():
    """(block byte budget, vmem_limit_bytes), generation aware (v7x: 64 MiB)."""
    try:
        cap = pltpu.get_tpu_info().vmem_capacity_bytes
    except Exception:
        cap = 64 << 20                            # conservative: assume v7x
    if cap <= (64 << 20):
        return 20 << 20, 48 << 20                 # v7x-class
    return 40 << 20, 96 << 20                     # v5e / v6e (128 MiB physical)


def _choose_tm(M128, col_bytes, budget_bytes):
    """Largest lane tile (multiple of 128) under the VMEM budget, capped at 512
    (vreg pressure of the unrolled T_out loop) and clamped so the parallel grid
    axis has >= 4 steps (>= 2 per TensorCore on v7x) whenever M allows it."""
    tm = (budget_bytes // max(col_bytes, 1)) // 128 * 128
    tm = int(max(128, min(tm, 512)))
    if M128 >= 4 * 128:
        tm = min(tm, max(128, (M128 // 4) // 128 * 128))
    else:
        tm = min(tm, M128)
    return tm


def temporal_conv(x_btnc, w, b, *, io_dtype=None, tm=None, approx_recip=True):
    """x_btnc: (B, T, N, Cin); w: (3, K, Cin, Cout); b: (3, Cout).

    Returns (B, T_out, N, Cout), matching TemporalConv.forward.
    (torch Conv2d weight W of shape (Cout, Cin, 1, K) maps to
     w[j, k, ci, co] = W_j[co, ci, 0, k].)
    io_dtype=jnp.bfloat16 halves activation/output HBM traffic (mem-bound kernel);
    the MXU accumulation and the gating epilogue stay in f32.
    """
    B, T, N, Cin = x_btnc.shape
    three, K, Cin_w, Cout = w.shape
    assert three == 3 and Cin_w == Cin and T >= K
    T_out = T - K + 1
    M = B * N

    io_dtype = jnp.dtype(io_dtype if io_dtype is not None else x_btnc.dtype)
    itemsize = io_dtype.itemsize
    align = max(8, 32 // itemsize)                # f32 -> 8 rows, bf16 -> 16 rows
    Cout_pad = _round_up(Cout, 8)                 # aligned P/PP/PPP sublane splits

    # ---- fused weights, one zero-padded variant per sublane offset ----------
    offsets = tuple(sorted({(t * Cin) % align for t in range(T_out)}))
    win_rows = _round_up(max(offsets) + K * Cin, align)
    w_f32 = w.astype(jnp.float32)
    wcat = jnp.zeros((3, Cout_pad, K * Cin), jnp.float32)
    wcat = wcat.at[:, :Cout, :].set(
        jnp.transpose(w_f32, (0, 3, 1, 2)).reshape(3, Cout, K * Cin))
    wcat = wcat.reshape(3 * Cout_pad, K * Cin)
    wvar = jnp.zeros((len(offsets), 3 * Cout_pad, win_rows), jnp.float32)
    for v, off in enumerate(offsets):
        wvar = wvar.at[v, :, off:off + K * Cin].set(wcat)
    wvar = wvar.astype(io_dtype)

    bcat = jnp.zeros((3, Cout_pad), jnp.float32).at[:, :Cout].set(
        b.astype(jnp.float32)).reshape(3 * Cout_pad, 1)

    # ---- lane-dense activation slab (T*Cin, B*N), padded for alignment ------
    R = T * Cin
    max_start = ((T_out - 1) * Cin // align) * align
    R_pad = max(_round_up(R, align), max_start + win_rows)

    M128 = _round_up(M, 128)
    budget, vmem_limit = _vmem_budget()
    if tm is None:
        col_bytes = 2 * (R_pad * itemsize + T_out * Cout * itemsize)  # dbl-buffered
        tm = _choose_tm(M128, col_bytes, budget)
    else:
        tm = max(128, (int(tm) // 128) * 128)
    M_pad = _round_up(M, tm)                      # every lane block full & unmasked

    # TODO(synk): for stacked STGCN layers, keep activations in this
    # (T*Cin, B*N) layout between layers (and/or try
    # CompilerParams(allow_input_fusion=[0])) to drop the two wrapper
    # transposes, which otherwise roughly double end-to-end HBM traffic.
    x2 = jnp.transpose(x_btnc, (1, 3, 0, 2)).reshape(R, M).astype(io_dtype)
    x2 = jnp.pad(x2, ((0, R_pad - R), (0, M_pad - M)))

    grid = (M_pad // tm,)
    cost = pl.CostEstimate(
        flops=int(2 * M_pad * T_out * (3 * Cout_pad) * win_rows),
        transcendentals=int(M_pad * T_out * Cout_pad),
        bytes_accessed=int(R_pad * M_pad * itemsize
                           + T_out * Cout * M_pad * itemsize
                           + grid[0] * (wvar.size * itemsize + bcat.size * 4)),
    )

    kern = functools.partial(
        temporal_conv_kernel, Cin=Cin, Cout=Cout, Cout_pad=Cout_pad, T_out=T_out,
        align=align, win_rows=win_rows, offsets=offsets, approx_recip=approx_recip)

    out2 = pl.pallas_call(
        kern,
        out_shape=jax.ShapeDtypeStruct((T_out, Cout, M_pad), io_dtype),
        grid_spec=pltpu.PrefetchScalarGridSpec(
            num_scalar_prefetch=0,
            grid=grid,
            in_specs=[
                pl.BlockSpec((R_pad, tm), lambda i: (0, i)),
                pl.BlockSpec((len(offsets), 3 * Cout_pad, win_rows),
                             lambda i: (0, 0, 0)),
                pl.BlockSpec((3 * Cout_pad, 1), lambda i: (0, 0)),
            ],
            out_specs=pl.BlockSpec((T_out, Cout, tm), lambda i: (0, 0, i)),
        ),
        compiler_params=pltpu.CompilerParams(
            dimension_semantics=("parallel",),
            vmem_limit_bytes=vmem_limit,
        ),
        cost_estimate=cost,
    )(x2, wvar, bcat)

    # (T_out, Cout, M) -> (B, T_out, N, Cout)
    out = out2[:, :, :M].reshape(T_out, Cout, B, N)
    return jnp.transpose(out, (2, 0, 3, 1))


def temporal_conv_ref(x_btnc, w, b):
    """Pure-JAX reference with identical math (for validation)."""
    B, T, N, Cin = x_btnc.shape
    _, K, _, Cout = w.shape
    T_out = T - K + 1
    xm = jnp.transpose(x_btnc, (0, 2, 1, 3)).reshape(B * N, T, Cin).astype(jnp.float32)
    outs = []
    for j in range(3):
        acc = jnp.zeros((B * N, T_out, Cout), jnp.float32) + b[j].astype(jnp.float32)
        for k in range(K):
            acc = acc + jnp.einsum('mtc,cd->mtd', xm[:, k:k + T_out, :],
                                   w[j, k].astype(jnp.float32))
        outs.append(acc)
    P, PP, PPP = outs
    H = jax.nn.relu(P * jax.nn.sigmoid(PP) + PPP)
    return jnp.transpose(H.reshape(B, N, T_out, Cout), (0, 2, 1, 3))


if __name__ == "__main__":
    # Small shapes consistent with the module's forward:
    # X: (batch, time, nodes, in_channels)
    B, T, N, Cin, Cout, K = 2, 8, 16, 4, 8, 3

    key = jax.random.PRNGKey(0)
    kx, kw, kb = jax.random.split(key, 3)

    x = jax.random.normal(kx, (B, T, N, Cin), dtype=jnp.float32)
    # Synthetic parameters, stored tap-major as (3 convs, K, Cin, Cout).
    w = 0.1 * jax.random.normal(kw, (3, K, Cin, Cout), dtype=jnp.float32)
    b = 0.1 * jax.random.normal(kb, (3, Cout), dtype=jnp.float32)

    ref = jax.block_until_ready(temporal_conv_ref(x, w, b))

    # Exact-math path (f32 I/O, exact sigmoid): validates kernel semantics.
    out = jax.block_until_ready(temporal_conv(x, w, b, approx_recip=False))
    assert out.shape == (B, T - K + 1, N, Cout), out.shape
    assert jnp.allclose(out, ref, atol=1e-5, rtol=1e-5), \
        float(jnp.max(jnp.abs(out - ref)))

    # Optimized path: bf16 activation/weight streams + EUP approx reciprocal.
    out_fast = jax.block_until_ready(
        temporal_conv(x, w, b, io_dtype=jnp.bfloat16))
    assert out_fast.shape == (B, T - K + 1, N, Cout), out_fast.shape
    assert jnp.allclose(out_fast.astype(jnp.float32), ref, atol=8e-2, rtol=8e-2), \
        float(jnp.max(jnp.abs(out_fast.astype(jnp.float32) - ref)))

    print("KERNEL_OK")
</pallas_src>

<mosaic_0001>
module attributes {stable_mosaic.version = 11 : i64} {
  func.func @temporal_conv_kernel(%arg0: i32, %arg1: memref<32x128xf32, #tpu.memory_space<vmem>>, %arg2: memref<2x24x16xf32, #tpu.memory_space<vmem>>, %arg3: memref<24x1xf32, #tpu.memory_space<vmem>>, %arg4: memref<6x8x128xf32, #tpu.memory_space<vmem>>) attributes {dimension_semantics = [#tpu.dimension_semantics<parallel>], iteration_bounds = array<i64: 1>, scalar_prefetch = 0 : i64, scratch_operands = 0 : i64, tpu.core_type = #tpu.core_type<tc>, window_params = [{transform_indices = @transform_0, window_bounds = array<i64: 32, 128>}, {pipeline_mode = #tpu.pipeline_mode<synchronous>, transform_indices = @transform_1, window_bounds = array<i64: 2, 24, 16>}, {pipeline_mode = #tpu.pipeline_mode<synchronous>, transform_indices = @transform_2, window_bounds = array<i64: 24, 1>}, {transform_indices = @transform_3, window_bounds = array<i64: 6, 8, 128>}]} {
    %c0 = arith.constant 0 : index
    %c0_0 = arith.constant 0 : index
    %0 = vector.load %arg3[%c0, %c0_0] : memref<24x1xf32, #tpu.memory_space<vmem>>, vector<24x1xf32>
    %1 = vector.shape_cast %0 : vector<24x1xf32> to vector<24x1xf32>
    %2 = vector.broadcast %1 : vector<24x1xf32> to vector<24x128xf32>
    %c0_1 = arith.constant 0 : index
    %c0_2 = arith.constant 0 : index
    %3 = vector.load %arg1[%c0_1, %c0_2] : memref<32x128xf32, #tpu.memory_space<vmem>>, vector<16x128xf32>
    %c0_3 = arith.constant 0 : index
    %c0_4 = arith.constant 0 : index
    %c0_5 = arith.constant 0 : index
    %4 = vector.load %arg2[%c0_3, %c0_4, %c0_5] : memref<2x24x16xf32, #tpu.memory_space<vmem>>, vector<1x24x16xf32>
    %5 = vector.shape_cast %4 : vector<1x24x16xf32> to vector<24x16xf32>
    %cst = arith.constant dense<0.000000e+00> : vector<24x128xf32>
    %6 = tpu.matmul %5, %3, %cst {dimension_numbers = #tpu.dot_dimension_numbers<[1], [0], [0], [1], [0, 0, 1, 1], [], []>} : vector<24x16xf32>, vector<16x128xf32>, vector<24x128xf32> -> vector<24x128xf32>
    %7 = arith.addf %6, %2 : vector<24x128xf32>
    %8 = vector.extract_strided_slice %7 {offsets = [0, 0], sizes = [8, 128], strides = [1, 1]} : vector<24x128xf32> to vector<8x128xf32>
    %9 = vector.extract_strided_slice %7 {offsets = [8, 0], sizes = [8, 128], strides = [1, 1]} : vector<24x128xf32> to vector<8x128xf32>
    %10 = vector.extract_strided_slice %7 {offsets = [16, 0], sizes = [8, 128], strides = [1, 1]} : vector<24x128xf32> to vector<8x128xf32>
    %11 = arith.negf %9 : vector<8x128xf32>
    %12 = math.exp %11 : vector<8x128xf32>
    %cst_6 = arith.constant 1.000000e+00 : f32
    %13 = vector.broadcast %cst_6 : f32 to vector<8x128xf32>
    %14 = arith.addf %13, %12 : vector<8x128xf32>
    %15 = arith.divf %13, %14 : vector<8x128xf32>
    %16 = arith.mulf %8, %15 : vector<8x128xf32>
    %17 = arith.addf %16, %10 : vector<8x128xf32>
    %cst_7 = arith.constant 0.000000e+00 : f32
    %18 = vector.broadcast %cst_7 : f32 to vector<8x128xf32>
    %19 = arith.maximumf %17, %18 : vector<8x128xf32>
    %c0_8 = arith.constant 0 : index
    %c0_9 = arith.constant 0 : index
    %c0_10 = arith.constant 0 : index
    %20 = vector.load %arg4[%c0_8, %c0_9, %c0_10] : memref<6x8x128xf32, #tpu.memory_space<vmem>>, vector<1x8x128xf32>
    %21 = vector.shape_cast %20 : vector<1x8x128xf32> to vector<8x128xf32>
    %22 = vector.shape_cast %19 : vector<8x128xf32> to vector<1x8x128xf32>
    tpu.vector_store %arg4[%c0_8, %c0_9, %c0_10], %22 {strides = array<i32>} : memref<6x8x128xf32, #tpu.memory_space<vmem>>, vector<1x8x128xf32>,
    %c0_11 = arith.constant 0 : index
    %c0_12 = arith.constant 0 : index
    %23 = vector.load %arg1[%c0_11, %c0_12] : memref<32x128xf32, #tpu.memory_space<vmem>>, vector<16x128xf32>
    %c1 = arith.constant 1 : index
    %c0_13 = arith.constant 0 : index
    %c0_14 = arith.constant 0 : index
    %24 = vector.load %arg2[%c1, %c0_13, %c0_14] : memref<2x24x16xf32, #tpu.memory_space<vmem>>, vector<1x24x16xf32>
    %25 = vector.shape_cast %24 : vector<1x24x16xf32> to vector<24x16xf32>
    %cst_15 = arith.constant dense<0.000000e+00> : vector<24x128xf32>
    %26 = tpu.matmul %25, %23, %cst_15 {dimension_numbers = #tpu.dot_dimension_numbers<[1], [0], [0], [1], [0, 0, 1, 1], [], []>} : vector<24x16xf32>, vector<16x128xf32>, vector<24x128xf32> -> vector<24x128xf32>
    %27 = arith.addf %26, %2 : vector<24x128xf32>
    %28 = vector.extract_strided_slice %27 {offsets = [0, 0], sizes = [8, 128], strides = [1, 1]} : vector<24x128xf32> to vector<8x128xf32>
    %29 = vector.extract_strided_slice %27 {offsets = [8, 0], sizes = [8, 128], strides = [1, 1]} : vector<24x128xf32> to vector<8x128xf32>
    %30 = vector.extract_strided_slice %27 {offsets = [16, 0], sizes = [8, 128], strides = [1, 1]} : vector<24x128xf32> to vector<8x128xf32>
    %31 = arith.negf %29 : vector<8x128xf32>
    %32 = math.exp %31 : vector<8x128xf32>
    %cst_16 = arith.constant 1.000000e+00 : f32
    %33 = vector.broadcast %cst_16 : f32 to vector<8x128xf32>
    %34 = arith.addf %33, %32 : vector<8x128xf32>
    %35 = arith.divf %33, %34 : vector<8x128xf32>
    %36 = arith.mulf %28, %35 : vector<8x128xf32>
    %37 = arith.addf %36, %30 : vector<8x128xf32>
    %cst_17 = arith.constant 0.000000e+00 : f32
    %38 = vector.broadcast %cst_17 : f32 to vector<8x128xf32>
    %39 = arith.maximumf %37, %38 : vector<8x128xf32>
    %c1_18 = arith.constant 1 : index
    %c0_19 = arith.constant 0 : index
    %c0_20 = arith.constant 0 : index
    %40 = vector.load %arg4[%c1_18, %c0_19, %c0_20] : memref<6x8x128xf32, #tpu.memory_space<vmem>>, vector<1x8x128xf32>
    %41 = vector.shape_cast %40 : vector<1x8x128xf32> to vector<8x128xf32>
    %42 = vector.shape_cast %39 : vector<8x128xf32> to vector<1x8x128xf32>
    tpu.vector_store %arg4[%c1_18, %c0_19, %c0_20], %42 {strides = array<i32>} : memref<6x8x128xf32, #tpu.memory_space<vmem>>, vector<1x8x128xf32>,
    %c8 = arith.constant 8 : index
    %c0_21 = arith.constant 0 : index
    %43 = vector.load %arg1[%c8, %c0_21] : memref<32x128xf32, #tpu.memory_space<vmem>>, vector<16x128xf32>
    %c0_22 = arith.constant 0 : index
    %c0_23 = arith.constant 0 : index
    %c0_24 = arith.constant 0 : index
    %44 = vector.load %arg2[%c0_22, %c0_23, %c0_24] : memref<2x24x16xf32, #tpu.memory_space<vmem>>, vector<1x24x16xf32>
    %45 = vector.shape_cast %44 : vector<1x24x16xf32> to vector<24x16xf32>
    %cst_25 = arith.constant dense<0.000000e+00> : vector<24x128xf32>
    %46 = tpu.matmul %45, %43, %cst_25 {dimension_numbers = #tpu.dot_dimension_numbers<[1], [0], [0], [1], [0, 0, 1, 1], [], []>} : vector<24x16xf32>, vector<16x128xf32>, vector<24x128xf32> -> vector<24x128xf32>
    %47 = arith.addf %46, %2 : vector<24x128xf32>
    %48 = vector.extract_strided_slice %47 {offsets = [0, 0], sizes = [8, 128], strides = [1, 1]} : vector<24x128xf32> to vector<8x128xf32>
    %49 = vector.extract_strided_slice %47 {offsets = [8, 0], sizes = [8, 128], strides = [1, 1]} : vector<24x128xf32> to vector<8x128xf32>
    %50 = vector.extract_strided_slice %47 {offsets = [16, 0], sizes = [8, 128], strides = [1, 1]} : vector<24x128xf32> to vector<8x128xf32>
    %51 = arith.negf %49 : vector<8x128xf32>
    %52 = math.exp %51 : vector<8x128xf32>
    %cst_26 = arith.constant 1.000000e+00 : f32
    %53 = vector.broadcast %cst_26 : f32 to vector<8x128xf32>
    %54 = arith.addf %53, %52 : vector<8x128xf32>
    %55 = arith.divf %53, %54 : vector<8x128xf32>
    %56 = arith.mulf %48, %55 : vector<8x128xf32>
    %57 = arith.addf %56, %50 : vector<8x128xf32>
    %cst_27 = arith.constant 0.000000e+00 : f32
    %58 = vector.broadcast %cst_27 : f32 to vector<8x128xf32>
    %59 = arith.maximumf %57, %58 : vector<8x128xf32>
    %c2 = arith.constant 2 : index
    %c0_28 = arith.constant 0 : index
    %c0_29 = arith.constant 0 : index
    %60 = vector.load %arg4[%c2, %c0_28, %c0_29] : memref<6x8x128xf32, #tpu.memory_space<vmem>>, vector<1x8x128xf32>
    %61 = vector.shape_cast %60 : vector<1x8x128xf32> to vector<8x128xf32>
    %62 = vector.shape_cast %59 : vector<8x128xf32> to vector<1x8x128xf32>
    tpu.vector_store %arg4[%c2, %c0_28, %c0_29], %62 {strides = array<i32>} : memref<6x8x128xf32, #tpu.memory_space<vmem>>, vector<1x8x128xf32>,
    %c8_30 = arith.constant 8 : index
    %c0_31 = arith.constant 0 : index
    %63 = vector.load %arg1[%c8_30, %c0_31] : memref<32x128xf32, #tpu.memory_space<vmem>>, vector<16x128xf32>
    %c1_32 = arith.constant 1 : index
    %c0_33 = arith.constant 0 : index
    %c0_34 = arith.constant 0 : index
    %64 = vector.load %arg2[%c1_32, %c0_33, %c0_34] : memref<2x24x16xf32, #tpu.memory_space<vmem>>, vector<1x24x16xf32>
    %65 = vector.shape_cast %64 : vector<1x24x16xf32> to vector<24x16xf32>
    %cst_35 = arith.constant dense<0.000000e+00> : vector<24x128xf32>
    %66 = tpu.matmul %65, %63, %cst_35 {dimension_numbers = #tpu.dot_dimension_numbers<[1], [0], [0], [1], [0, 0, 1, 1], [], []>} : vector<24x16xf32>, vector<16x128xf32>, vector<24x128xf32> -> vector<24x128xf32>
    %67 = arith.addf %66, %2 : vector<24x128xf32>
    %68 = vector.extract_strided_slice %67 {offsets = [0, 0], sizes = [8, 128], strides = [1, 1]} : vector<24x128xf32> to vector<8x128xf32>
    %69 = vector.extract_strided_slice %67 {offsets = [8, 0], sizes = [8, 128], strides = [1, 1]} : vector<24x128xf32> to vector<8x128xf32>
    %70 = vector.extract_strided_slice %67 {offsets = [16, 0], sizes = [8, 128], strides = [1, 1]} : vector<24x128xf32> to vector<8x128xf32>
    %71 = arith.negf %69 : vector<8x128xf32>
    %72 = math.exp %71 : vector<8x128xf32>
    %cst_36 = arith.constant 1.000000e+00 : f32
    %73 = vector.broadcast %cst_36 : f32 to vector<8x128xf32>
    %74 = arith.addf %73, %72 : vector<8x128xf32>
    %75 = arith.divf %73, %74 : vector<8x128xf32>
    %76 = arith.mulf %68, %75 : vector<8x128xf32>
    %77 = arith.addf %76, %70 : vector<8x128xf32>
    %cst_37 = arith.constant 0.000000e+00 : f32
    %78 = vector.broadcast %cst_37 : f32 to vector<8x128xf32>
    %79 = arith.maximumf %77, %78 : vector<8x128xf32>
    %c3 = arith.constant 3 : index
    %c0_38 = arith.constant 0 : index
    %c0_39 = arith.constant 0 : index
    %80 = vector.load %arg4[%c3, %c0_38, %c0_39] : memref<6x8x128xf32, #tpu.memory_space<vmem>>, vector<1x8x128xf32>
    %81 = vector.shape_cast %80 : vector<1x8x128xf32> to vector<8x128xf32>
    %82 = vector.shape_cast %79 : vector<8x128xf32> to vector<1x8x128xf32>
    tpu.vector_store %arg4[%c3, %c0_38, %c0_39], %82 {strides = array<i32>} : memref<6x8x128xf32, #tpu.memory_space<vmem>>, vector<1x8x128xf32>,
    %c16 = arith.constant 16 : index
    %c0_40 = arith.constant 0 : index
    %83 = vector.load %arg1[%c16, %c0_40] : memref<32x128xf32, #tpu.memory_space<vmem>>, vector<16x128xf32>
    %c0_41 = arith.constant 0 : index
    %c0_42 = arith.constant 0 : index
    %c0_43 = arith.constant 0 : index
    %84 = vector.load %arg2[%c0_41, %c0_42, %c0_43] : memref<2x24x16xf32, #tpu.memory_space<vmem>>, vector<1x24x16xf32>
    %85 = vector.shape_cast %84 : vector<1x24x16xf32> to vector<24x16xf32>
    %cst_44 = arith.constant dense<0.000000e+00> : vector<24x128xf32>
    %86 = tpu.matmul %85, %83, %cst_44 {dimension_numbers = #tpu.dot_dimension_numbers<[1], [0], [0], [1], [0, 0, 1, 1], [], []>} : vector<24x16xf32>, vector<16x128xf32>, vector<24x128xf32> -> vector<24x128xf32>
    %87 = arith.addf %86, %2 : vector<24x128xf32>
    %88 = vector.extract_strided_slice %87 {offsets = [0, 0], sizes = [8, 128], strides = [1, 1]} : vector<24x128xf32> to vector<8x128xf32>
    %89 = vector.extract_strided_slice %87 {offsets = [8, 0], sizes = [8, 128], strides = [1, 1]} : vector<24x128xf32> to vector<8x128xf32>
    %90 = vector.extract_strided_slice %87 {offsets = [16, 0], sizes = [8, 128], strides = [1, 1]} : vector<24x128xf32> to vector<8x128xf32>
    %91 = arith.negf %89 : vector<8x128xf32>
    %92 = math.exp %91 : vector<8x128xf32>
    %cst_45 = arith.constant 1.000000e+00 : f32
    %93 = vector.broadcast %cst_45 : f32 to vector<8x128xf32>
    %94 = arith.addf %93, %92 : vector<8x128xf32>
    %95 = arith.divf %93, %94 : vector<8x128xf32>
    %96 = arith.mulf %88, %95 : vector<8x128xf32>
    %97 = arith.addf %96, %90 : vector<8x128xf32>
    %cst_46 = arith.constant 0.000000e+00 : f32
    %98 = vector.broadcast %cst_46 : f32 to vector<8x128xf32>
    %99 = arith.maximumf %97, %98 : vector<8x128xf32>
    %c4 = arith.constant 4 : index
    %c0_47 = arith.constant 0 : index
    %c0_48 = arith.constant 0 : index
    %100 = vector.load %arg4[%c4, %c0_47, %c0_48] : memref<6x8x128xf32, #tpu.memory_space<vmem>>, vector<1x8x128xf32>
    %101 = vector.shape_cast %100 : vector<1x8x128xf32> to vector<8x128xf32>
    %102 = vector.shape_cast %99 : vector<8x128xf32> to vector<1x8x128xf32>
    tpu.vector_store %arg4[%c4, %c0_47, %c0_48], %102 {strides = array<i32>} : memref<6x8x128xf32, #tpu.memory_space<vmem>>, vector<1x8x128xf32>,
    %c16_49 = arith.constant 16 : index
    %c0_50 = arith.constant 0 : index
    %103 = vector.load %arg1[%c16_49, %c0_50] : memref<32x128xf32, #tpu.memory_space<vmem>>, vector<16x128xf32>
    %c1_51 = arith.constant 1 : index
    %c0_52 = arith.constant 0 : index
    %c0_53 = arith.constant 0 : index
    %104 = vector.load %arg2[%c1_51, %c0_52, %c0_53] : memref<2x24x16xf32, #tpu.memory_space<vmem>>, vector<1x24x16xf32>
    %105 = vector.shape_cast %104 : vector<1x24x16xf32> to vector<24x16xf32>
    %cst_54 = arith.constant dense<0.000000e+00> : vector<24x128xf32>
    %106 = tpu.matmul %105, %103, %cst_54 {dimension_numbers = #tpu.dot_dimension_numbers<[1], [0], [0], [1], [0, 0, 1, 1], [], []>} : vector<24x16xf32>, vector<16x128xf32>, vector<24x128xf32> -> vector<24x128xf32>
    %107 = arith.addf %106, %2 : vector<24x128xf32>
    %108 = vector.extract_strided_slice %107 {offsets = [0, 0], sizes = [8, 128], strides = [1, 1]} : vector<24x128xf32> to vector<8x128xf32>
    %109 = vector.extract_strided_slice %107 {offsets = [8, 0], sizes = [8, 128], strides = [1, 1]} : vector<24x128xf32> to vector<8x128xf32>
    %110 = vector.extract_strided_slice %107 {offsets = [16, 0], sizes = [8, 128], strides = [1, 1]} : vector<24x128xf32> to vector<8x128xf32>
    %111 = arith.negf %109 : vector<8x128xf32>
    %112 = math.exp %111 : vector<8x128xf32>
    %cst_55 = arith.constant 1.000000e+00 : f32
    %113 = vector.broadcast %cst_55 : f32 to vector<8x128xf32>
    %114 = arith.addf %113, %112 : vector<8x128xf32>
    %115 = arith.divf %113, %114 : vector<8x128xf32>
    %116 = arith.mulf %108, %115 : vector<8x128xf32>
    %117 = arith.addf %116, %110 : vector<8x128xf32>
    %cst_56 = arith.constant 0.000000e+00 : f32
    %118 = vector.broadcast %cst_56 : f32 to vector<8x128xf32>
    %119 = arith.maximumf %117, %118 : vector<8x128xf32>
    %c5 = arith.constant 5 : index
    %c0_57 = arith.constant 0 : index
    %c0_58 = arith.constant 0 : index
    %120 = vector.load %arg4[%c5, %c0_57, %c0_58] : memref<6x8x128xf32, #tpu.memory_space<vmem>>, vector<1x8x128xf32>
    %121 = vector.shape_cast %120 : vector<1x8x128xf32> to vector<8x128xf32>
    %122 = vector.shape_cast %119 : vector<8x128xf32> to vector<1x8x128xf32>
    tpu.vector_store %arg4[%c5, %c0_57, %c0_58], %122 {strides = array<i32>} : memref<6x8x128xf32, #tpu.memory_space<vmem>>, vector<1x8x128xf32>,
    return
  }
  func.func @transform_0(%arg0: i32) -> (i32, i32) {
    %c0_i32 = arith.constant 0 : i32
    %c0_i32_0 = arith.constant 0 : i32
    return %c0_i32, %arg0 : i32, i32
  }
  func.func @transform_1(%arg0: i32) -> (i32, i32, i32) {
    %c0_i32 = arith.constant 0 : i32
    %c0_i32_0 = arith.constant 0 : i32
    %c0_i32_1 = arith.constant 0 : i32
    %c0_i32_2 = arith.constant 0 : i32
    return %c0_i32, %c0_i32_0, %c0_i32_1 : i32, i32, i32
  }
  func.func @transform_2(%arg0: i32) -> (i32, i32) {
    %c0_i32 = arith.constant 0 : i32
    %c0_i32_0 = arith.constant 0 : i32
    %c0_i32_1 = arith.constant 0 : i32
    return %c0_i32, %c0_i32_0 : i32, i32
  }
  func.func @transform_3(%arg0: i32) -> (i32, i32, i32) {
    %c0_i32 = arith.constant 0 : i32
    %c0_i32_0 = arith.constant 0 : i32
    %c0_i32_1 = arith.constant 0 : i32
    return %c0_i32, %c0_i32_0, %arg0 : i32, i32, i32
  }
}

</mosaic_0001>

<llo_original>
// kernel: tpu_custom_call.1
$region0: #{tpu_custom_call.1}
  #allocation0 [shape = 'u32[]', space=smem, size = 0x4, offset = 0x4, fixed_abs, tag = 'smem constant byte address 0x4 - core index']
  #allocation1 [shape = 'u32[144,128]{1,0:T(1,128)}', space=vmem, size = 0x12000, scoped, tag = 'internal scratch']
  %s0 = inlined_call_operand.vmem [shape: f32[32,128], index: 0, kind: input, shape index: {}]
  %s1 = inlined_call_operand.vmem [shape: f32[2,24,16], index: 1, kind: input, shape index: {}]
  %s2 = inlined_call_operand.vmem [shape: f32[24,1], index: 2, kind: input, shape index: {}]
  %s3 = inlined_call_operand.hbm [shape: f32[6,8,128], index: 3, kind: output, shape index: {}]
  %s4 = sld [smem:[#allocation0]]
  $region22: #{tpu_custom_call.1} parent=0
    _
  %s6 = ssub.s32 1, %s4
  %s7 = scalar_select 0, %s6, %s4
  $region1: #{tpu_custom_call.1} parent=0
    #allocation2 [shape = 'u8[24576]{0}', space=vmem, size = 0x6000, scoped, tag = 'output window, operand 0, single buffered']
    #allocation3 [shape = 's32[1]{0}', space=sflag, size = 0x4, scoped, tag = 'scoped memory for tpu_custom_call.1']
    %8 = vsyncpa [#allocation3], 0
    // Predicated region
    $region2: #{tpu_custom_call.1} parent=1 // pred_check
      _
    $region3: #{tpu_custom_call.1} parent=1 // pred_check_branch
      %10 = sbr.rel (0) target = $region5
    $region4: #{tpu_custom_call.1} parent=1 // pred_region
      _
    $region5: #{tpu_custom_call.1} parent=1 // pred_fallthru
      _
    // Predicated region
    $region6: #{tpu_custom_call.1} parent=1 // pred_check
      _
    $region7: #{tpu_custom_call.1} parent=1 // pred_check_branch
      %12 = sbr.rel (0) target = $region9
    $region8: #{tpu_custom_call.1} parent=1 // pred_region
      _
    $region9: #{tpu_custom_call.1} parent=1 // pred_fallthru
      _
    // Predicated region
    $region10: #{tpu_custom_call.1} parent=1 // pred_check
      _
    $region11: #{tpu_custom_call.1} parent=1 // pred_check_branch
      %14 = sbr.rel (0) target = $region13
    $region12: #{tpu_custom_call.1} parent=1 // pred_region
      _
    $region13: #{tpu_custom_call.1} parent=1 // pred_fallthru
      _
    %v15 = vld [vmem:[%s2] sm:$0xff]
    %v16 = vld [vmem:[%s2 + $0x8] sm:$0xff]
    %v17 = vld [vmem:[%s2 + $0x10] sm:$0xff]
    %19 = vset.pattern.permute.xlu0 0
    %20 = vperm.xlu0 %19, %v15
    %v21 = vpop.permute.xlu0 %20
    %24 = vset.pattern.permute.xlu0 0
    %25 = vperm.xlu0 %24, %v16
    %v26 = vpop.permute.xlu0 %25
    %29 = vset.pattern.permute.xlu0 0
    %30 = vperm.xlu0 %29, %v17
    %v31 = vpop.permute.xlu0 %30
    %v33 = vld [vmem:[%s0] sm:$0xff]
    %v34 = vld [vmem:[%s0 + $0x8] sm:$0xff]
    %v35 = vld [vmem:[%s1] sm:$0xff]
    %v36 = vld [vmem:[%s1 + $0x8] sm:$0xff]
    %v37 = vld [vmem:[%s1 + $0x10] sm:$0xff]
    %vm38 = vcmask 130048
    %v40 = vsel %vm38, %v35, 0
    %v43 = vsel %vm38, %v36, 0
    %v46 = vsel %vm38, %v37, 0
    %48 = vmatprep.subr.mxu0 0.0
    %49 = vmatpush1.msra.mxu0 %v33
    %50 = vmatprep.subr.mxu0 0.0
    %51 = vmatpush1.msra.mxu0 %v34
    %52 = vmatprep.subr.mxu0 0.0
    %53 = vmatpush1.msra.mxu0 0.0
    %54 = vmatprep.subr.mxu0 0.0
    %55 = vmatpush1.msra.mxu0 0.0
    %56 = vmatprep.subr.mxu0 0.0
    %57 = vmatpush1.msra.mxu0 0.0
    %58 = vmatprep.subr.mxu0 0.0
    %59 = vmatpush1.msra.mxu0 0.0
    %60 = vmatprep.subr.mxu0 0.0
    %61 = vmatpush1.msra.mxu0 0.0
    %62 = vmatprep.subr.mxu0 0.0
    %63 = vmatpush1.msra.mxu0 0.0
    %64 = vmatprep.subr.mxu0 0.0
    %65 = vmatpush1.msra.mxu0 0.0
    %66 = vmatprep.subr.mxu0 0.0
    %67 = vmatpush1.msra.mxu0 0.0
    %68 = vmatprep.subr.mxu0 0.0
    %69 = vmatpush1.msra.mxu0 0.0
    %70 = vmatprep.subr.mxu0 0.0
    %71 = vmatpush1.msra.mxu0 0.0
    %72 = vmatprep.subr.mxu0 0.0
    %73 = vmatpush1.msra.mxu0 0.0
    %74 = vmatprep.subr.mxu0 0.0
    %75 = vmatpush1.msra.mxu0 0.0
    %76 = vmatprep.subr.mxu0 0.0
    %77 = vmatpush1.msra.mxu0 0.0
    %78 = vmatprep.subr.mxu0 0.0
    %79 = vmatpush1.msra.mxu0 0.0
    %80 = vmatprep.subr.mxu0 0.0
    %81 = vmatpush1.msra.mxu0 0.0
    %82 = vmatprep.subr.mxu0 0.0
    %83 = vmatpush1.msra.mxu0 0.0
    %84 = vmatprep.subr.mxu0 0.0
    %85 = vmatpush1.msra.mxu0 0.0
    %86 = vmatprep.subr.mxu0 0.0
    %87 = vmatpush1.msra.mxu0 0.0
    %88 = vmatprep.subr.mxu0 0.0
    %89 = vmatpush1.msra.mxu0 0.0
    %90 = vmatprep.subr.mxu0 0.0
    %91 = vmatpush1.msra.mxu0 0.0
    %92 = vmatprep.subr.mxu0 0.0
    %93 = vmatpush1.msra.mxu0 0.0
    %94 = vmatprep.subr.mxu0 0.0
    %95 = vmatpush1.msra.mxu0 0.0
    %96 = vmatprep.subr.mxu0 0.0
    %97 = vmatpush1.msra.mxu0 0.0
    %98 = vmatprep.subr.mxu0 0.0
    %99 = vmatpush1.msra.mxu0 0.0
    %100 = vmatprep.subr.mxu0 0.0
    %101 = vmatpush1.msra.mxu0 0.0
    %102 = vmatprep.subr.mxu0 0.0
    %103 = vmatpush1.msra.mxu0 0.0
    %104 = vmatprep.subr.mxu0 0.0
    %105 = vmatpush1.msra.mxu0 0.0
    %106 = vmatprep.subr.mxu0 0.0
    %107 = vmatpush1.msra.mxu0 0.0
    %108 = vmatprep.subr.mxu0 0.0
    %109 = vmatpush1.msra.mxu0 0.0
    %110 = vmatprep.subr.mxu0 0.0
    %111 = vmatpush1.msra.mxu0 0.0
    %112 = vmatprep.mubr.f32.mxu0 0.0
    %113 = vmatmul.mubr.f32.gmra.mrb[0].mxu0 %v40
    %v114 = vpop.f32.mrb[0].mxu0
    %v115 = vadd.f32 %v21, %v114
    %v116 = vpop.f32.mrb[0].mxu0
    %117 = vmatprep.mubr.f32.mxu0 0.0
    %118 = vmatmul.mubr.f32.gmra.mrb[0].mxu0 %v43
    %v119 = vpop.f32.mrb[0].mxu0
    %v120 = vadd.f32 %v26, %v119
    %v121 = vpop.f32.mrb[0].mxu0
    %122 = vmatprep.mubr.f32.mxu0 0.0
    %123 = vmatmul.mubr.f32.gmra.mrb[0].mxu0 %v46
    %v124 = vpop.f32.mrb[0].mxu0
    %v125 = vadd.f32 %v31, %v124
    %v126 = vpop.f32.mrb[0].mxu0
    %127 = vdwg.mxu0
    %v128 = vxor.u32 %v120, 2147483648
    %v129 = vmul.f32 %v128, 1.442695
    %v130 = vpow.pop %v129
    %v131 = vadd.f32 %v130, 1.0
    %v132 = vrcp.pop %v131
    %v133 = vmul.f32 1.0, %v132
    %v134 = vmul.f32 %v115, %v133
    %v135 = vadd.f32 %v134, %v125
    %v136 = vmax.f32 %v135, 0.0
    %137 = vst [vmem:[#allocation2] sm:$0xff] %v136
    %v138 = vld [vmem:[%s0] sm:$0xff]
    %v139 = vld [vmem:[%s0 + $0x8] sm:$0xff]
    %s140 = scalar_lea.vmem %s1, 24
    %v141 = vld [vmem:[%s140] sm:$0xff]
    %v142 = vld [vmem:[%s140 + $0x8] sm:$0xff]
    %v143 = vld [vmem:[%s140 + $0x10] sm:$0xff]
    %v145 = vsel %vm38, %v141, 0
    %v148 = vsel %vm38, %v142, 0
    %v151 = vsel %vm38, %v143, 0
    %153 = vmatprep.subr.mxu0 0.0
    %154 = vmatpush1.msra.mxu0 %v138
    %155 = vmatprep.subr.mxu0 0.0
    %156 = vmatpush1.msra.mxu0 %v139
    %157 = vmatprep.subr.mxu0 0.0
    %158 = vmatpush1.msra.mxu0 0.0
    %159 = vmatprep.subr.mxu0 0.0
    %160 = vmatpush1.msra.mxu0 0.0
    %161 = vmatprep.subr.mxu0 0.0
    %162 = vmatpush1.msra.mxu0 0.0
    %163 = vmatprep.subr.mxu0 0.0
    %164 = vmatpush1.msra.mxu0 0.0
    %165 = vmatprep.subr.mxu0 0.0
    %166 = vmatpush1.msra.mxu0 0.0
    %167 = vmatprep.subr.mxu0 0.0
    %168 = vmatpush1.msra.mxu0 0.0
    %169 = vmatprep.subr.mxu0 0.0
    %170 = vmatpush1.msra.mxu0 0.0
    %171 = vmatprep.subr.mxu0 0.0
    %172 = vmatpush1.msra.mxu0 0.0
    %173 = vmatprep.subr.mxu0 0.0
    %174 = vmatpush1.msra.mxu0 0.0
    %175 = vmatprep.subr.mxu0 0.0
    %176 = vmatpush1.msra.mxu0 0.0
    %177 = vmatprep.subr.mxu0 0.0
    %178 = vmatpush1.msra.mxu0 0.0
    %179 = vmatprep.subr.mxu0 0.0
    %180 = vmatpush1.msra.mxu0 0.0
    %181 = vmatprep.subr.mxu0 0.0
    %182 = vmatpush1.msra.mxu0 0.0
    %183 = vmatprep.subr.mxu0 0.0
    %184 = vmatpush1.msra.mxu0 0.0
    %185 = vmatprep.subr.mxu0 0.0
    %186 = vmatpush1.msra.mxu0 0.0
    %187 = vmatprep.subr.mxu0 0.0
    %188 = vmatpush1.msra.mxu0 0.0
    %189 = vmatprep.subr.mxu0 0.0
    %190 = vmatpush1.msra.mxu0 0.0
    %191 = vmatprep.subr.mxu0 0.0
    %192 = vmatpush1.msra.mxu0 0.0
    %193 = vmatprep.subr.mxu0 0.0
    %194 = vmatpush1.msra.mxu0 0.0
    %195 = vmatprep.subr.mxu0 0.0
    %196 = vmatpush1.msra.mxu0 0.0
    %197 = vmatprep.subr.mxu0 0.0
    %198 = vmatpush1.msra.mxu0 0.0
    %199 = vmatprep.subr.mxu0 0.0
    %200 = vmatpush1.msra.mxu0 0.0
    %201 = vmatprep.subr.mxu0 0.0
    %202 = vmatpush1.msra.mxu0 0.0
    %203 = vmatprep.subr.mxu0 0.0
    %204 = vmatpush1.msra.mxu0 0.0
    %205 = vmatprep.subr.mxu0 0.0
    %206 = vmatpush1.msra.mxu0 0.0
    %207 = vmatprep.subr.mxu0 0.0
    %208 = vmatpush1.msra.mxu0 0.0
    %209 = vmatprep.subr.mxu0 0.0
    %210 = vmatpush1.msra.mxu0 0.0
    %211 = vmatprep.subr.mxu0 0.0
    %212 = vmatpush1.msra.mxu0 0.0
    %213 = vmatprep.subr.mxu0 0.0
    %214 = vmatpush1.msra.mxu0 0.0
    %215 = vmatprep.subr.mxu0 0.0
    %216 = vmatpush1.msra.mxu0 0.0
    %217 = vmatprep.mubr.f32.mxu0 0.0
    %218 = vmatmul.mubr.f32.gmra.mrb[0].mxu0 %v145
    %v219 = vpop.f32.mrb[0].mxu0
    %v220 = vadd.f32 %v21, %v219
    %v221 = vpop.f32.mrb[0].mxu0
    %222 = vmatprep.mubr.f32.mxu0 0.0
    %223 = vmatmul.mubr.f32.gmra.mrb[0].mxu0 %v148
    %v224 = vpop.f32.mrb[0].mxu0
    %v225 = vadd.f32 %v26, %v224
    %v226 = vpop.f32.mrb[0].mxu0
    %227 = vmatprep.mubr.f32.mxu0 0.0
    %228 = vmatmul.mubr.f32.gmra.mrb[0].mxu0 %v151
    %v229 = vpop.f32.mrb[0].mxu0
    %v230 = vadd.f32 %v31, %v229
    %v231 = vpop.f32.mrb[0].mxu0
    %232 = vdwg.mxu0
    %v233 = vxor.u32 %v225, 2147483648
    %v234 = vmul.f32 %v233, 1.442695
    %v235 = vpow.pop %v234
    %v236 = vadd.f32 %v235, 1.0
    %v237 = vrcp.pop %v236
    %v238 = vmul.f32 1.0, %v237
    %v239 = vmul.f32 %v220, %v238
    %v240 = vadd.f32 %v239, %v230
    %v241 = vmax.f32 %v240, 0.0
    %s242 = scalar_lea.vmem [#allocation2], 8
    %243 = vst [vmem:[%s242] sm:$0xff] %v241
    %v244 = vld [vmem:[%s0 + $0x8] sm:$0xff]
    %v245 = vld [vmem:[%s0 + $0x10] sm:$0xff]
    %v246 = vld [vmem:[%s1] sm:$0xff]
    %v247 = vld [vmem:[%s1 + $0x8] sm:$0xff]
    %v248 = vld [vmem:[%s1 + $0x10] sm:$0xff]
    %v250 = vsel %vm38, %v246, 0
    %v253 = vsel %vm38, %v247, 0
    %v256 = vsel %vm38, %v248, 0
    %258 = vmatprep.subr.mxu0 0.0
    %259 = vmatpush1.msra.mxu0 %v244
    %260 = vmatprep.subr.mxu0 0.0
    %261 = vmatpush1.msra.mxu0 %v245
    %262 = vmatprep.subr.mxu0 0.0
    %263 = vmatpush1.msra.mxu0 0.0
    %264 = vmatprep.subr.mxu0 0.0
    %265 = vmatpush1.msra.mxu0 0.0
    %266 = vmatprep.subr.mxu0 0.0
    %267 = vmatpush1.msra.mxu0 0.0
    %268 = vmatprep.subr.mxu0 0.0
    %269 = vmatpush1.msra.mxu0 0.0
    %270 = vmatprep.subr.mxu0 0.0
    %271 = vmatpush1.msra.mxu0 0.0
    %272 = vmatprep.subr.mxu0 0.0
    %273 = vmatpush1.msra.mxu0 0.0
    %274 = vmatprep.subr.mxu0 0.0
    %275 = vmatpush1.msra.mxu0 0.0
    %276 = vmatprep.subr.mxu0 0.0
    %277 = vmatpush1.msra.mxu0 0.0
    %278 = vmatprep.subr.mxu0 0.0
    %279 = vmatpush1.msra.mxu0 0.0
    %280 = vmatprep.subr.mxu0 0.0
    %281 = vmatpush1.msra.mxu0 0.0
    %282 = vmatprep.subr.mxu0 0.0
    %283 = vmatpush1.msra.mxu0 0.0
    %284 = vmatprep.subr.mxu0 0.0
    %285 = vmatpush1.msra.mxu0 0.0
    %286 = vmatprep.subr.mxu0 0.0
    %287 = vmatpush1.msra.mxu0 0.0
    %288 = vmatprep.subr.mxu0 0.0
    %289 = vmatpush1.msra.mxu0 0.0
    %290 = vmatprep.subr.mxu0 0.0
    %291 = vmatpush1.msra.mxu0 0.0
    %292 = vmatprep.subr.mxu0 0.0
    %293 = vmatpush1.msra.mxu0 0.0
    %294 = vmatprep.subr.mxu0 0.0
    %295 = vmatpush1.msra.mxu0 0.0
    %296 = vmatprep.subr.mxu0 0.0
    %297 = vmatpush1.msra.mxu0 0.0
    %298 = vmatprep.subr.mxu0 0.0
    %299 = vmatpush1.msra.mxu0 0.0
    %300 = vmatprep.subr.mxu0 0.0
    %301 = vmatpush1.msra.mxu0 0.0
    %302 = vmatprep.subr.mxu0 0.0
    %303 = vmatpush1.msra.mxu0 0.0
    %304 = vmatprep.subr.mxu0 0.0
    %305 = vmatpush1.msra.mxu0 0.0
    %306 = vmatprep.subr.mxu0 0.0
    %307 = vmatpush1.msra.mxu0 0.0
    %308 = vmatprep.subr.mxu0 0.0
    %309 = vmatpush1.msra.mxu0 0.0
    %310 = vmatprep.subr.mxu0 0.0
    %311 = vmatpush1.msra.mxu0 0.0
    %312 = vmatprep.subr.mxu0 0.0
    %313 = vmatpush1.msra.mxu0 0.0
    %314 = vmatprep.subr.mxu0 0.0
    %315 = vmatpush1.msra.mxu0 0.0
    %316 = vmatprep.subr.mxu0 0.0
    %317 = vmatpush1.msra.mxu0 0.0
    %318 = vmatprep.subr.mxu0 0.0
    %319 = vmatpush1.msra.mxu0 0.0
    %320 = vmatprep.subr.mxu0 0.0
    %321 = vmatpush1.msra.mxu0 0.0
    %322 = vmatprep.mubr.f32.mxu0 0.0
    %323 = vmatmul.mubr.f32.gmra.mrb[0].mxu0 %v250
    %v324 = vpop.f32.mrb[0].mxu0
    %v325 = vadd.f32 %v21, %v324
    %v326 = vpop.f32.mrb[0].mxu0
    %327 = vmatprep.mubr.f32.mxu0 0.0
    %328 = vmatmul.mubr.f32.gmra.mrb[0].mxu0 %v253
    %v329 = vpop.f32.mrb[0].mxu0
    %v330 = vadd.f32 %v26, %v329
    %v331 = vpop.f32.mrb[0].mxu0
    %332 = vmatprep.mubr.f32.mxu0 0.0
    %333 = vmatmul.mubr.f32.gmra.mrb[0].mxu0 %v256
    %v334 = vpop.f32.mrb[0].mxu0
    %v335 = vadd.f32 %v31, %v334
    %v336 = vpop.f32.mrb[0].mxu0
    %337 = vdwg.mxu0
    %v338 = vxor.u32 %v330, 2147483648
    %v339 = vmul.f32 %v338, 1.442695
    %v340 = vpow.pop %v339
    %v341 = vadd.f32 %v340, 1.0
    %v342 = vrcp.pop %v341
    %v343 = vmul.f32 1.0, %v342
    %v344 = vmul.f32 %v325, %v343
    %v345 = vadd.f32 %v344, %v335
    %v346 = vmax.f32 %v345, 0.0
    %s347 = scalar_lea.vmem [#allocation2], 16
    %348 = vst [vmem:[%s347] sm:$0xff] %v346
    %v349 = vld [vmem:[%s0 + $0x8] sm:$0xff]
    %v350 = vld [vmem:[%s0 + $0x10] sm:$0xff]
    %v351 = vld [vmem:[%s140] sm:$0xff]
    %v352 = vld [vmem:[%s140 + $0x8] sm:$0xff]
    %v353 = vld [vmem:[%s140 + $0x10] sm:$0xff]
    %v355 = vsel %vm38, %v351, 0
    %v358 = vsel %vm38, %v352, 0
    %v361 = vsel %vm38, %v353, 0
    %363 = vmatprep.subr.mxu0 0.0
    %364 = vmatpush1.msra.mxu0 %v349
    %365 = vmatprep.subr.mxu0 0.0
    %366 = vmatpush1.msra.mxu0 %v350
    %367 = vmatprep.subr.mxu0 0.0
    %368 = vmatpush1.msra.mxu0 0.0
    %369 = vmatprep.subr.mxu0 0.0
    %370 = vmatpush1.msra.mxu0 0.0
    %371 = vmatprep.subr.mxu0 0.0
    %372 = vmatpush1.msra.mxu0 0.0
    %373 = vmatprep.subr.mxu0 0.0
    %374 = vmatpush1.msra.mxu0 0.0
    %375 = vmatprep.subr.mxu0 0.0
    %376 = vmatpush1.msra.mxu0 0.0
    %377 = vmatprep.subr.mxu0 0.0
    %378 = vmatpush1.msra.mxu0 0.0
    %379 = vmatprep.subr.mxu0 0.0
    %380 = vmatpush1.msra.mxu0 0.0
    %381 = vmatprep.subr.mxu0 0.0
    %382 = vmatpush1.msra.mxu0 0.0
    %383 = vmatprep.subr.mxu0 0.0
    %384 = vmatpush1.msra.mxu0 0.0
    %385 = vmatprep.subr.mxu0 0.0
    %386 = vmatpush1.msra.mxu0 0.0
    %387 = vmatprep.subr.mxu0 0.0
    %388 = vmatpush1.msra.mxu0 0.0
    %389 = vmatprep.subr.mxu0 0.0
    %390 = vmatpush1.msra.mxu0 0.0
    %391 = vmatprep.subr.mxu0 0.0
    %392 = vmatpush1.msra.mxu0 0.0
    %393 = vmatprep.subr.mxu0 0.0
    %394 = vmatpush1.msra.mxu0 0.0
    %395 = vmatprep.subr.mxu0 0.0
    %396 = vmatpush1.msra.mxu0 0.0
    %397 = vmatprep.subr.mxu0 0.0
    %398 = vmatpush1.msra.mxu0 0.0
    %399 = vmatprep.subr.mxu0 0.0
    %400 = vmatpush1.msra.mxu0 0.0
    %401 = vmatprep.subr.mxu0 0.0
    %402 = vmatpush1.msra.mxu0 0.0
    %403 = vmatprep.subr.mxu0 0.0
    %404 = vmatpush1.msra.mxu0 0.0
    %405 = vmatprep.subr.mxu0 0.0
    %406 = vmatpush1.msra.mxu0 0.0
    %407 = vmatprep.subr.mxu0 0.0
    %408 = vmatpush1.msra.mxu0 0.0
    %409 = vmatprep.subr.mxu0 0.0
    %410 = vmatpush1.msra.mxu0 0.0
    %411 = vmatprep.subr.mxu0 0.0
    %412 = vmatpush1.msra.mxu0 0.0
    %413 = vmatprep.subr.mxu0 0.0
    %414 = vmatpush1.msra.mxu0 0.0
    %415 = vmatprep.subr.mxu0 0.0
    %416 = vmatpush1.msra.mxu0 0.0
    %417 = vmatprep.subr.mxu0 0.0
    %418 = vmatpush1.msra.mxu0 0.0
    %419 = vmatprep.subr.mxu0 0.0
    %420 = vmatpush1.msra.mxu0 0.0
    %421 = vmatprep.subr.mxu0 0.0
    %422 = vmatpush1.msra.mxu0 0.0
    %423 = vmatprep.subr.mxu0 0.0
    %424 = vmatpush1.msra.mxu0 0.0
    %425 = vmatprep.subr.mxu0 0.0
    %426 = vmatpush1.msra.mxu0 0.0
    %427 = vmatprep.mubr.f32.mxu0 0.0
    %428 = vmatmul.mubr.f32.gmra.mrb[0].mxu0 %v355
    %v429 = vpop.f32.mrb[0].mxu0
    %v430 = vadd.f32 %v21, %v429
    %v431 = vpop.f32.mrb[0].mxu0
    %432 = vmatprep.mubr.f32.mxu0 0.0
    %433 = vmatmul.mubr.f32.gmra.mrb[0].mxu0 %v358
    %v434 = vpop.f32.mrb[0].mxu0
    %v435 = vadd.f32 %v26, %v434
    %v436 = vpop.f32.mrb[0].mxu0
    %437 = vmatprep.mubr.f32.mxu0 0.0
    %438 = vmatmul.mubr.f32.gmra.mrb[0].mxu0 %v361
    %v439 = vpop.f32.mrb[0].mxu0
    %v440 = vadd.f32 %v31, %v439
    %v441 = vpop.f32.mrb[0].mxu0
    %442 = vdwg.mxu0
    %v443 = vxor.u32 %v435, 2147483648
    %v444 = vmul.f32 %v443, 1.442695
    %v445 = vpow.pop %v444
    %v446 = vadd.f32 %v445, 1.0
    %v447 = vrcp.pop %v446
    %v448 = vmul.f32 1.0, %v447
    %v449 = vmul.f32 %v430, %v448
    %v450 = vadd.f32 %v449, %v440
    %v451 = vmax.f32 %v450, 0.0
    %s452 = scalar_lea.vmem [#allocation2], 24
    %453 = vst [vmem:[%s452] sm:$0xff] %v451
    %v454 = vld [vmem:[%s0 + $0x10] sm:$0xff]
    %v455 = vld [vmem:[%s0 + $0x18] sm:$0xff]
    %v456 = vld [vmem:[%s1] sm:$0xff]
    %v457 = vld [vmem:[%s1 + $0x8] sm:$0xff]
    %v458 = vld [vmem:[%s1 + $0x10] sm:$0xff]
    %v460 = vsel %vm38, %v456, 0
    %v463 = vsel %vm38, %v457, 0
    %v466 = vsel %vm38, %v458, 0
    %468 = vmatprep.subr.mxu0 0.0
    %469 = vmatpush1.msra.mxu0 %v454
    %470 = vmatprep.subr.mxu0 0.0
    %471 = vmatpush1.msra.mxu0 %v455
    %472 = vmatprep.subr.mxu0 0.0
    %473 = vmatpush1.msra.mxu0 0.0
    %474 = vmatprep.subr.mxu0 0.0
    %475 = vmatpush1.msra.mxu0 0.0
    %476 = vmatprep.subr.mxu0 0.0
    %477 = vmatpush1.msra.mxu0 0.0
    %478 = vmatprep.subr.mxu0 0.0
    %479 = vmatpush1.msra.mxu0 0.0
    %480 = vmatprep.subr.mxu0 0.0
    %481 = vmatpush1.msra.mxu0 0.0
    %482 = vmatprep.subr.mxu0 0.0
    %483 = vmatpush1.msra.mxu0 0.0
    %484 = vmatprep.subr.mxu0 0.0
    %485 = vmatpush1.msra.mxu0 0.0
    %486 = vmatprep.subr.mxu0 0.0
    %487 = vmatpush1.msra.mxu0 0.0
    %488 = vmatprep.subr.mxu0 0.0
    %489 = vmatpush1.msra.mxu0 0.0
    %490 = vmatprep.subr.mxu0 0.0
    %491 = vmatpush1.msra.mxu0 0.0
    %492 = vmatprep.subr.mxu0 0.0
    %493 = vmatpush1.msra.mxu0 0.0
    %494 = vmatprep.subr.mxu0 0.0
    %495 = vmatpush1.msra.mxu0 0.0
    %496 = vmatprep.subr.mxu0 0.0
    %497 = vmatpush1.msra.mxu0 0.0
    %498 = vmatprep.subr.mxu0 0.0
    %499 = vmatpush1.msra.mxu0 0.0
    %500 = vmatprep.subr.mxu0 0.0
    %501 = vmatpush1.msra.mxu0 0.0
    %502 = vmatprep.subr.mxu0 0.0
    %503 = vmatpush1.msra.mxu0 0.0
    %504 = vmatprep.subr.mxu0 0.0
    %505 = vmatpush1.msra.mxu0 0.0
    %506 = vmatprep.subr.mxu0 0.0
    %507 = vmatpush1.msra.mxu0 0.0
    %508 = vmatprep.subr.mxu0 0.0
    %509 = vmatpush1.msra.mxu0 0.0
    %510 = vmatprep.subr.mxu0 0.0
    %511 = vmatpush1.msra.mxu0 0.0
    %512 = vmatprep.subr.mxu0 0.0
    %513 = vmatpush1.msra.mxu0 0.0
    %514 = vmatprep.subr.mxu0 0.0
    %515 = vmatpush1.msra.mxu0 0.0
    %516 = vmatprep.subr.mxu0 0.0
    %517 = vmatpush1.msra.mxu0 0.0
    %518 = vmatprep.subr.mxu0 0.0
    %519 = vmatpush1.msra.mxu0 0.0
    %520 = vmatprep.subr.mxu0 0.0
    %521 = vmatpush1.msra.mxu0 0.0
    %522 = vmatprep.subr.mxu0 0.0
    %523 = vmatpush1.msra.mxu0 0.0
    %524 = vmatprep.subr.mxu0 0.0
    %525 = vmatpush1.msra.mxu0 0.0
    %526 = vmatprep.subr.mxu0 0.0
    %527 = vmatpush1.msra.mxu0 0.0
    %528 = vmatprep.subr.mxu0 0.0
    %529 = vmatpush1.msra.mxu0 0.0
    %530 = vmatprep.subr.mxu0 0.0
    %531 = vmatpush1.msra.mxu0 0.0
    %532 = vmatprep.mubr.f32.mxu0 0.0
    %533 = vmatmul.mubr.f32.gmra.mrb[0].mxu0 %v460
    %v534 = vpop.f32.mrb[0].mxu0
    %v535 = vadd.f32 %v21, %v534
    %v536 = vpop.f32.mrb[0].mxu0
    %537 = vmatprep.mubr.f32.mxu0 0.0
    %538 = vmatmul.mubr.f32.gmra.mrb[0].mxu0 %v463
    %v539 = vpop.f32.mrb[0].mxu0
    %v540 = vadd.f32 %v26, %v539
    %v541 = vpop.f32.mrb[0].mxu0
    %542 = vmatprep.mubr.f32.mxu0 0.0
    %543 = vmatmul.mubr.f32.gmra.mrb[0].mxu0 %v466
    %v544 = vpop.f32.mrb[0].mxu0
    %v545 = vadd.f32 %v31, %v544
    %v546 = vpop.f32.mrb[0].mxu0
    %547 = vdwg.mxu0
    %v548 = vxor.u32 %v540, 2147483648
    %v549 = vmul.f32 %v548, 1.442695
    %v550 = vpow.pop %v549
    %v551 = vadd.f32 %v550, 1.0
    %v552 = vrcp.pop %v551
    %v553 = vmul.f32 1.0, %v552
    %v554 = vmul.f32 %v535, %v553
    %v555 = vadd.f32 %v554, %v545
    %v556 = vmax.f32 %v555, 0.0
    %s557 = scalar_lea.vmem [#allocation2], 32
    %558 = vst [vmem:[%s557] sm:$0xff] %v556
    %v559 = vld [vmem:[%s0 + $0x10] sm:$0xff]
    %v560 = vld [vmem:[%s0 + $0x18] sm:$0xff]
    %v561 = vld [vmem:[%s140] sm:$0xff]
    %v562 = vld [vmem:[%s140 + $0x8] sm:$0xff]
    %v563 = vld [vmem:[%s140 + $0x10] sm:$0xff]
    %v565 = vsel %vm38, %v561, 0
    %v568 = vsel %vm38, %v562, 0
    %v571 = vsel %vm38, %v563, 0
    %573 = vmatprep.subr.mxu0 0.0
    %574 = vmatpush1.msra.mxu0 %v559
    %575 = vmatprep.subr.mxu0 0.0
    %576 = vmatpush1.msra.mxu0 %v560
    %577 = vmatprep.subr.mxu0 0.0
    %578 = vmatpush1.msra.mxu0 0.0
    %579 = vmatprep.subr.mxu0 0.0
    %580 = vmatpush1.msra.mxu0 0.0
    %581 = vmatprep.subr.mxu0 0.0
    %582 = vmatpush1.msra.mxu0 0.0
    %583 = vmatprep.subr.mxu0 0.0
    %584 = vmatpush1.msra.mxu0 0.0
    %585 = vmatprep.subr.mxu0 0.0
    %586 = vmatpush1.msra.mxu0 0.0
    %587 = vmatprep.subr.mxu0 0.0
    %588 = vmatpush1.msra.mxu0 0.0
    %589 = vmatprep.subr.mxu0 0.0
    %590 = vmatpush1.msra.mxu0 0.0
    %591 = vmatprep.subr.mxu0 0.0
    %592 = vmatpush1.msra.mxu0 0.0
    %593 = vmatprep.subr.mxu0 0.0
    %594 = vmatpush1.msra.mxu0 0.0
    %595 = vmatprep.subr.mxu0 0.0
    %596 = vmatpush1.msra.mxu0 0.0
    %597 = vmatprep.subr.mxu0 0.0
    %598 = vmatpush1.msra.mxu0 0.0
    %599 = vmatprep.subr.mxu0 0.0
    %600 = vmatpush1.msra.mxu0 0.0
    %601 = vmatprep.subr.mxu0 0.0
    %602 = vmatpush1.msra.mxu0 0.0
    %603 = vmatprep.subr.mxu0 0.0
    %604 = vmatpush1.msra.mxu0 0.0
    %605 = vmatprep.subr.mxu0 0.0
    %606 = vmatpush1.msra.mxu0 0.0
    %607 = vmatprep.subr.mxu0 0.0
    %608 = vmatpush1.msra.mxu0 0.0
    %609 = vmatprep.subr.mxu0 0.0
    %610 = vmatpush1.msra.mxu0 0.0
    %611 = vmatprep.subr.mxu0 0.0
    %612 = vmatpush1.msra.mxu0 0.0
    %613 = vmatprep.subr.mxu0 0.0
    %614 = vmatpush1.msra.mxu0 0.0
    %615 = vmatprep.subr.mxu0 0.0
    %616 = vmatpush1.msra.mxu0 0.0
    %617 = vmatprep.subr.mxu0 0.0
    %618 = vmatpush1.msra.mxu0 0.0
    %619 = vmatprep.subr.mxu0 0.0
    %620 = vmatpush1.msra.mxu0 0.0
    %621 = vmatprep.subr.mxu0 0.0
    %622 = vmatpush1.msra.mxu0 0.0
    %623 = vmatprep.subr.mxu0 0.0
    %624 = vmatpush1.msra.mxu0 0.0
    %625 = vmatprep.subr.mxu0 0.0
    %626 = vmatpush1.msra.mxu0 0.0
    %627 = vmatprep.subr.mxu0 0.0
    %628 = vmatpush1.msra.mxu0 0.0
    %629 = vmatprep.subr.mxu0 0.0
    %630 = vmatpush1.msra.mxu0 0.0
    %631 = vmatprep.subr.mxu0 0.0
    %632 = vmatpush1.msra.mxu0 0.0
    %633 = vmatprep.subr.mxu0 0.0
    %634 = vmatpush1.msra.mxu0 0.0
    %635 = vmatprep.subr.mxu0 0.0
    %636 = vmatpush1.msra.mxu0 0.0
    %637 = vmatprep.mubr.f32.mxu0 0.0
    %638 = vmatmul.mubr.f32.gmra.mrb[0].mxu0 %v565
    %v639 = vpop.f32.mrb[0].mxu0
    %v640 = vadd.f32 %v21, %v639
    %v641 = vpop.f32.mrb[0].mxu0
    %642 = vmatprep.mubr.f32.mxu0 0.0
    %643 = vmatmul.mubr.f32.gmra.mrb[0].mxu0 %v568
    %v644 = vpop.f32.mrb[0].mxu0
    %v645 = vadd.f32 %v26, %v644
    %v646 = vpop.f32.mrb[0].mxu0
    %647 = vmatprep.mubr.f32.mxu0 0.0
    %648 = vmatmul.mubr.f32.gmra.mrb[0].mxu0 %v571
    %v649 = vpop.f32.mrb[0].mxu0
    %v650 = vadd.f32 %v31, %v649
    %v651 = vpop.f32.mrb[0].mxu0
    %652 = vdwg.mxu0
    %v653 = vxor.u32 %v645, 2147483648
    %v654 = vmul.f32 %v653, 1.442695
    %v655 = vpow.pop %v654
    %v656 = vadd.f32 %v655, 1.0
    %v657 = vrcp.pop %v656
    %v658 = vmul.f32 1.0, %v657
    %v659 = vmul.f32 %v640, %v658
    %v660 = vadd.f32 %v659, %v650
    %v661 = vmax.f32 %v660, 0.0
    %s662 = scalar_lea.vmem [#allocation2], 40
    %663 = vst [vmem:[%s662] sm:$0xff] %v661
    // Predicated region
    $region14: #{tpu_custom_call.1} parent=1 // pred_check
      _
    $region15: #{tpu_custom_call.1} parent=1 // pred_check_branch
      %665 = sbr.rel (0) target = $region17
    $region16: #{tpu_custom_call.1} parent=1 // pred_region
      %s667 = ssub.s32 768, 768
      %668 = vsyncadd [#allocation3], %s667
      %s669 = sshll.u32 [#allocation2], 4
      %s670 = int_to_ptr.vmem [resolvable:$true] %s669
      %675 = dma.vmem_to_hbm [thread:$0]  %s670, 768, %s3, [#allocation3], 128, 128, 8
    $region17: #{tpu_custom_call.1} parent=1 // pred_fallthru
      _
    // Predicated region
    $region18: #{tpu_custom_call.1} parent=1 // pred_check
      _
    $region19: #{tpu_custom_call.1} parent=1 // pred_check_branch
      %677 = sbr.rel (0) target = $region21
    $region20: #{tpu_custom_call.1} parent=1 // pred_region
      %678 = dma.done [#allocation3], 768
    $region21: #{tpu_custom_call.1} parent=1 // pred_fallthru
      _
    %679 = vsyncpa [#allocation3], 1

</llo_original>
